<compile_context>
chip_gen: v6e
topology: v6e:2x2x1
jax: 0.10.0
libtpu: 0.0.40
codegen_flags: <defaults>
</compile_context>

<pallas_src>
import math
from functools import partial
from typing import List, Sequence, Tuple

import jax
import jax.numpy as jnp
from jax.experimental import pallas as pl
from jax.experimental.pallas import tpu as pltpu


_GOLDEN32 = 0x9E3779B9
_MIX1 = 0x7FEB352D
_MIX2 = 0x846CA68B
_COMP_SALT = 0x85EBCA6B

_LANE = 128
_COL_CANDIDATES = (2048, 1024, 512, 256, 128)


# ---------------------------------------------------------------------------
# Kernel
# ---------------------------------------------------------------------------
def _make_fused_dropout_kernel(rates: Tuple[float, ...], n_cols: int,
                               block_rows: int):
    """Kernel applying dropout with static per-component rates to n tensors."""
    n = len(rates)
    active = [c for c, r in enumerate(rates) if r > 0.0]

    def kernel(seed_ref, *refs):
        x_refs = refs[:n]
        o_refs = refs[n:]

        # Identity components: plain streaming copy, no hash work.
        for c in range(n):
            if rates[c] <= 0.0:
                o_refs[c][...] = x_refs[c][...]

        if not active:
            return

        # ---- hoisted, shared hash base: one full-strength mix per tile ----
        tile = pl.program_id(0)
        base_seed = seed_ref[0].astype(jnp.uint32) * jnp.uint32(_GOLDEN32)
        row_off = tile * block_rows
        shape = (block_rows, n_cols)
        rows = jax.lax.broadcasted_iota(jnp.int32, shape, 0) + row_off
        cols = jax.lax.broadcasted_iota(jnp.int32, shape, 1)
        # gid wraps (mod 2^32) beyond 2^32 elements; fine for embeddings.
        gid = (rows * n_cols + cols).astype(jnp.uint32)

        h0 = gid ^ base_seed
        h0 = h0 ^ (h0 >> jnp.uint32(16))
        h0 = h0 * jnp.uint32(_MIX1)
        h0 = h0 ^ (h0 >> jnp.uint32(15))
        h0 = h0 * jnp.uint32(_MIX2)
        h0 = h0 ^ (h0 >> jnp.uint32(16))

        for c in active:
            keep_prob = 1.0 - float(rates[c])
            # keep iff hash < keep_prob * 2^32 (<= 2^-32 rounding bias).
            threshold = jnp.uint32(min(int(keep_prob * 4294967296.0),
                                       0xFFFFFFFF))
            # Cheap per-component remix: odd multiplier is a bijection on
            # uint32, so uniformity (hence keep probability) is preserved.
            salt = jnp.uint32((((c + 1) * _COMP_SALT) | 1) & 0xFFFFFFFF)
            hc = h0 * salt
            hc = hc ^ (hc >> jnp.uint32(16))
            keep = hc < threshold

            x = x_refs[c][...]
            scale = jnp.asarray(1.0 / keep_prob, dtype=x.dtype)
            o_refs[c][...] = jnp.where(keep, x * scale, jnp.zeros_like(x))

    return kernel


# ---------------------------------------------------------------------------
# Block / VMEM sizing (generation aware)
# ---------------------------------------------------------------------------
_VMEM_BUDGET_CACHE = None


def _vmem_budget():
    """Returns (block_budget_bytes, vmem_limit_bytes) for this TPU generation."""
    global _VMEM_BUDGET_CACHE
    if _VMEM_BUDGET_CACHE is not None:
        return _VMEM_BUDGET_CACHE
    cap = None
    try:
        info = pltpu.get_tpu_info()
        cap = getattr(info, "vmem_capacity_bytes", None)
    except Exception:
        cap = None
    if cap is not None and cap >= 96 * 1024 * 1024:
        # v5e / v6e: 128 MiB physical VMEM -> bigger blocks, fewer grid steps.
        budget = (40 * 1024 * 1024, 64 * 1024 * 1024)
    elif cap is not None:
        # v7x: 64 MiB physical -> stay within the 32 MiB scoped default.
        budget = (22 * 1024 * 1024, 32 * 1024 * 1024)
    else:
        # Unknown (e.g. interpret mode): conservative.
        budget = (14 * 1024 * 1024, 32 * 1024 * 1024)
    _VMEM_BUDGET_CACHE = budget
    return budget


def _pick_block_rows(n_rows: int, n_cols: int, itemsize: int,
                     n_components: int, budget_bytes: int) -> int:
    # Live VMEM per block row:
    #   data tiles: 2 buffers x (in + out) x n_components x itemsize
    #   hash temporaries: ~3 live block-sized uint32 arrays
    per_row = n_cols * (4 * n_components * itemsize + 3 * 4)
    rows = budget_bytes // max(1, per_row)
    rows = max(8, (rows // 8) * 8)          # sublane aligned
    if n_rows >= 16:
        # Guarantee >= 2 grid steps so both v7x TensorCores get work.
        half = max(8, ((-(-n_rows // 2)) // 8) * 8)
        rows = min(rows, half)
    if rows >= n_rows:
        return n_rows
    return int(rows)


# ---------------------------------------------------------------------------
# pallas_call wrapper
# ---------------------------------------------------------------------------
def _fused_dropout_2d(seed_arr, xs, rates):
    """All xs are 2D lane-dense (rows, C), same shape/dtype. One fused call."""
    n = len(xs)
    n_rows, n_cols = xs[0].shape
    itemsize = jnp.dtype(xs[0].dtype).itemsize
    block_budget, vmem_limit = _vmem_budget()
    block_rows = _pick_block_rows(n_rows, n_cols, itemsize, n, block_budget)
    grid = (pl.cdiv(n_rows, block_rows),)

    kernel = _make_fused_dropout_kernel(rates, n_cols, block_rows)
    tile_spec = pl.BlockSpec((block_rows, n_cols), lambda i: (i, 0))

    n_elems = n_rows * n_cols
    n_active = sum(1 for r in rates if r > 0.0)
    total_bytes = n * n_elems * itemsize
    cost = pl.CostEstimate(
        flops=n_elems * (13 + 5 * max(1, n_active)),
        transcendentals=0,
        bytes_accessed=2 * total_bytes,
    )

    return pl.pallas_call(
        kernel,
        out_shape=tuple(jax.ShapeDtypeStruct(x.shape, x.dtype) for x in xs),
        grid=grid,
        in_specs=[pl.BlockSpec(memory_space=pltpu.MemorySpace.SMEM)]  # seed
                 + [tile_spec] * n,
        out_specs=tuple(tile_spec for _ in xs),
        compiler_params=pltpu.CompilerParams(
            dimension_semantics=("parallel",),   # v7x: shard rows over 2 TCs
            vmem_limit_bytes=vmem_limit,
        ),
        cost_estimate=cost,
    )(seed_arr, *xs)


def _choose_cols(n_elems: int):
    """Pick a lane-dense row width C (multiple of 128) and flat pad amount."""
    # Prefer a C that also leaves >= 16 rows (megacore split on v7x).
    for c in _COL_CANDIDATES:
        if n_elems % c == 0 and n_elems // c >= 16:
            return c, 0
    for c in _COL_CANDIDATES:
        if n_elems % c == 0:
            return c, 0
    # No multiple-of-128 factor: pad the flat array up to a lane multiple.
    pad = (-n_elems) % _LANE
    return _LANE, pad


def _dropout_same_shape(seed_arr, xs, rates):
    """Apply dropout to tensors of identical shape/dtype (rates are static)."""
    orig_shape = xs[0].shape
    n_elems = math.prod(orig_shape) if orig_shape else 1
    if n_elems == 0:
        return tuple(xs)

    c, pad = _choose_cols(n_elems)

    def to2d(x):
        flat = x.reshape(-1)
        if pad:
            flat = jnp.pad(flat, (0, pad))
        return flat.reshape(-1, c)

    xs2 = tuple(to2d(x) for x in xs)
    outs = _fused_dropout_2d(seed_arr, xs2, rates)

    def back(o):
        flat = o.reshape(-1)
        if pad:
            flat = flat[:n_elems]
        return flat.reshape(orig_shape)

    return tuple(back(o) for o in outs)


class ComplexDropoutPallas:
    """JAX/Pallas equivalent of toolbox.nn.ComplexEmbedding.ComplexDropout."""

    def __init__(self, dropout_rate_list: List[float]):
        self.dropout_rate_list = [float(r) for r in dropout_rate_list]
        self._jit_cache = {}

    def _fn_for(self, rates: Tuple[float, ...]):
        fn = self._jit_cache.get(rates)
        if fn is None:
            fn = jax.jit(partial(_dropout_same_shape, rates=rates))
            self._jit_cache[rates] = fn
        return fn

    def __call__(self, complex_numbers: Sequence[jax.Array], *,
                 seed=0, training: bool = True):
        xs = list(complex_numbers)
        if not training or not xs:
            return tuple(xs)

        rates = tuple(self.dropout_rate_list[i] for i in range(len(xs)))
        if all(r <= 0.0 for r in rates):
            return tuple(xs)

        # Seed is a traced array (dynamic): no recompilation when it changes.
        seed_arr = jnp.asarray([seed], dtype=jnp.int32).reshape((1,))

        same = all(x.shape == xs[0].shape and x.dtype == xs[0].dtype
                   for x in xs)
        if same:
            # One fused pallas_call for every component.
            return tuple(self._fn_for(rates)(seed_arr, tuple(xs)))

        # Fallback: per-component calls; offset seed so masks stay independent.
        out = []
        for idx, (x, r) in enumerate(zip(xs, rates)):
            if r <= 0.0:
                out.append(x)
            else:
                out.append(self._fn_for((r,))(
                    seed_arr + jnp.int32(idx * 7919), (x,))[0])
        return tuple(out)


if __name__ == "__main__":
    key = jax.random.PRNGKey(0)
    k_re, k_im = jax.random.split(key)

    batch, hidden = 8, 128   # small, sublane/lane aligned
    x_re = jax.random.normal(k_re, (batch, hidden), dtype=jnp.float32)
    x_im = jax.random.normal(k_im, (batch, hidden), dtype=jnp.float32)

    dropout_rates = [0.1, 0.2]
    module = ComplexDropoutPallas(dropout_rates)

    y_re, y_im = module((x_re, x_im), seed=1234, training=True)
    jax.block_until_ready((y_re, y_im))

    ok = True
    # Sanity: surviving elements equal x / (1 - p); dropped ones are 0.
    for x, y, p in [(x_re, y_re, 0.1), (x_im, y_im, 0.2)]:
        kept = y != 0.0
        expected = x / (1.0 - p)
        ok &= bool(jnp.allclose(jnp.where(kept, y, expected), expected,
                                rtol=1e-5, atol=1e-5))
        drop_frac = 1.0 - float(jnp.mean(kept.astype(jnp.float32)))
        ok &= abs(drop_frac - p) < 0.15  # loose statistical check

    # Different seed -> different mask (and no retrace: seed is dynamic).
    y2_re, _ = module((x_re, x_im), seed=4321, training=True)
    jax.block_until_ready(y2_re)
    ok &= bool(jnp.any((y_re == 0.0) != (y2_re == 0.0)))

    # Eval mode is identity.
    e_re, e_im = module((x_re, x_im), training=False)
    ok &= bool(jnp.array_equal(e_re, x_re)) and bool(jnp.array_equal(e_im, x_im))

    # Non-128-multiple embedding width exercises the lane-dense flatten path.
    x3_re = jax.random.normal(k_re, (16, 100), dtype=jnp.float32)
    x3_im = jax.random.normal(k_im, (16, 100), dtype=jnp.float32)
    z_re, z_im = module((x3_re, x3_im), seed=7, training=True)
    jax.block_until_ready((z_re, z_im))
    ok &= z_re.shape == x3_re.shape and z_im.shape == x3_im.shape
    kept3 = z_re != 0.0
    ok &= bool(jnp.allclose(jnp.where(kept3, z_re, x3_re / 0.9),
                            x3_re / 0.9, rtol=1e-5, atol=1e-5))

    print("KERNEL_OK" if ok else "KERNEL_MISMATCH")
</pallas_src>

<mosaic_0001>
module attributes {stable_mosaic.version = 11 : i64} {
  func.func @kernel(%arg0: i32, %arg1: memref<1xi32, #tpu.memory_space<smem>>, %arg2: memref<1x1024xf32, #tpu.memory_space<vmem>>, %arg3: memref<1x1024xf32, #tpu.memory_space<vmem>>, %arg4: memref<1x1024xf32, #tpu.memory_space<vmem>>, %arg5: memref<1x1024xf32, #tpu.memory_space<vmem>>) attributes {dimension_semantics = [#tpu.dimension_semantics<parallel>], iteration_bounds = array<i64: 1>, scalar_prefetch = 0 : i64, scratch_operands = 0 : i64, tpu.core_type = #tpu.core_type<tc>, window_params = [{transform_indices = @transform_0, window_bounds = array<i64: 1>}, {transform_indices = @transform_1, window_bounds = array<i64: 1, 1024>}, {transform_indices = @transform_2, window_bounds = array<i64: 1, 1024>}, {transform_indices = @transform_3, window_bounds = array<i64: 1, 1024>}, {transform_indices = @transform_4, window_bounds = array<i64: 1, 1024>}]} {
    %c0 = arith.constant 0 : index
    %0 = memref.load %arg1[%c0] : memref<1xi32, #tpu.memory_space<smem>>
    %c-1640531527_i32 = arith.constant -1640531527 : i32
    %1 = arith.muli %0, %c-1640531527_i32 : i32
    %c1_i32 = arith.constant 1 : i32
    %2 = arith.muli %arg0, %c1_i32 : i32
    %3 = tpu.iota {dimensions = array<i32: 0>} : vector<1x1024xi32>
    %4 = vector.broadcast %2 : i32 to vector<1x1024xi32>
    %5 = arith.addi %3, %4 : vector<1x1024xi32>
    %6 = tpu.iota {dimensions = array<i32: 1>} : vector<1x1024xi32>
    %c1024_i32 = arith.constant 1024 : i32
    %7 = vector.broadcast %c1024_i32 : i32 to vector<1x1024xi32>
    %8 = arith.muli %5, %7 : vector<1x1024xi32>
    %9 = arith.addi %8, %6 : vector<1x1024xi32>
    %10 = vector.broadcast %1 : i32 to vector<1x1024xi32>
    %11 = arith.xori %9, %10 : vector<1x1024xi32>
    %c16_i32 = arith.constant 16 : i32
    %12 = vector.broadcast %c16_i32 : i32 to vector<1x1024xi32>
    %13 = arith.shrui %11, %12 : vector<1x1024xi32>
    %14 = arith.xori %11, %13 : vector<1x1024xi32>
    %c2146121005_i32 = arith.constant 2146121005 : i32
    %15 = vector.broadcast %c2146121005_i32 : i32 to vector<1x1024xi32>
    %16 = arith.muli %14, %15 : vector<1x1024xi32>
    %c15_i32 = arith.constant 15 : i32
    %17 = vector.broadcast %c15_i32 : i32 to vector<1x1024xi32>
    %18 = arith.shrui %16, %17 : vector<1x1024xi32>
    %19 = arith.xori %16, %18 : vector<1x1024xi32>
    %c-2073254261_i32 = arith.constant -2073254261 : i32
    %20 = vector.broadcast %c-2073254261_i32 : i32 to vector<1x1024xi32>
    %21 = arith.muli %19, %20 : vector<1x1024xi32>
    %c16_i32_0 = arith.constant 16 : i32
    %22 = vector.broadcast %c16_i32_0 : i32 to vector<1x1024xi32>
    %23 = arith.shrui %21, %22 : vector<1x1024xi32>
    %24 = arith.xori %21, %23 : vector<1x1024xi32>
    %c-2048144789_i32 = arith.constant -2048144789 : i32
    %25 = vector.broadcast %c-2048144789_i32 : i32 to vector<1x1024xi32>
    %26 = arith.muli %24, %25 : vector<1x1024xi32>
    %c16_i32_1 = arith.constant 16 : i32
    %27 = vector.broadcast %c16_i32_1 : i32 to vector<1x1024xi32>
    %28 = arith.shrui %26, %27 : vector<1x1024xi32>
    %29 = arith.xori %26, %28 : vector<1x1024xi32>
    %c-429496730_i32 = arith.constant -429496730 : i32
    %30 = vector.broadcast %c-429496730_i32 : i32 to vector<1x1024xi32>
    %31 = arith.cmpi ult, %29, %30 : vector<1x1024xi32>
    %c0_2 = arith.constant 0 : index
    %c0_3 = arith.constant 0 : index
    %32 = vector.load %arg2[%c0_2, %c0_3] : memref<1x1024xf32, #tpu.memory_space<vmem>>, vector<1x1024xf32>
    %cst = arith.constant 1.11111116 : f32
    %33 = vector.broadcast %cst : f32 to vector<1x1024xf32>
    %34 = arith.mulf %32, %33 : vector<1x1024xf32>
    %cst_4 = arith.constant 0.000000e+00 : f32
    %35 = vector.broadcast %cst_4 : f32 to vector<1x1024xf32>
    %36 = arith.select %31, %34, %35 : vector<1x1024xi1>, vector<1x1024xf32>
    %c0_5 = arith.constant 0 : index
    %c0_6 = arith.constant 0 : index
    %37 = vector.load %arg4[%c0_5, %c0_6] : memref<1x1024xf32, #tpu.memory_space<vmem>>, vector<1x1024xf32>
    tpu.vector_store %arg4[%c0_5, %c0_6], %36 {strides = array<i32>} : memref<1x1024xf32, #tpu.memory_space<vmem>>, vector<1x1024xf32>,
    %c198677719_i32 = arith.constant 198677719 : i32
    %38 = vector.broadcast %c198677719_i32 : i32 to vector<1x1024xi32>
    %39 = arith.muli %24, %38 : vector<1x1024xi32>
    %c16_i32_7 = arith.constant 16 : i32
    %40 = vector.broadcast %c16_i32_7 : i32 to vector<1x1024xi32>
    %41 = arith.shrui %39, %40 : vector<1x1024xi32>
    %42 = arith.xori %39, %41 : vector<1x1024xi32>
    %c-858993460_i32 = arith.constant -858993460 : i32
    %43 = vector.broadcast %c-858993460_i32 : i32 to vector<1x1024xi32>
    %44 = arith.cmpi ult, %42, %43 : vector<1x1024xi32>
    %c0_8 = arith.constant 0 : index
    %c0_9 = arith.constant 0 : index
    %45 = vector.load %arg3[%c0_8, %c0_9] : memref<1x1024xf32, #tpu.memory_space<vmem>>, vector<1x1024xf32>
    %cst_10 = arith.constant 1.250000e+00 : f32
    %46 = vector.broadcast %cst_10 : f32 to vector<1x1024xf32>
    %47 = arith.mulf %45, %46 : vector<1x1024xf32>
    %cst_11 = arith.constant 0.000000e+00 : f32
    %48 = vector.broadcast %cst_11 : f32 to vector<1x1024xf32>
    %49 = arith.select %44, %47, %48 : vector<1x1024xi1>, vector<1x1024xf32>
    %c0_12 = arith.constant 0 : index
    %c0_13 = arith.constant 0 : index
    %50 = vector.load %arg5[%c0_12, %c0_13] : memref<1x1024xf32, #tpu.memory_space<vmem>>, vector<1x1024xf32>
    tpu.vector_store %arg5[%c0_12, %c0_13], %49 {strides = array<i32>} : memref<1x1024xf32, #tpu.memory_space<vmem>>, vector<1x1024xf32>,
    return
  }
  func.func @transform_0(%arg0: i32) -> i32 {
    %c0_i32 = arith.constant 0 : i32
    %c0_i32_0 = arith.constant 0 : i32
    return %c0_i32 : i32
  }
  func.func @transform_1(%arg0: i32) -> (i32, i32) {
    %c0_i32 = arith.constant 0 : i32
    %c0_i32_0 = arith.constant 0 : i32
    return %arg0, %c0_i32 : i32, i32
  }
  func.func @transform_2(%arg0: i32) -> (i32, i32) {
    %c0_i32 = arith.constant 0 : i32
    %c0_i32_0 = arith.constant 0 : i32
    return %arg0, %c0_i32 : i32, i32
  }
  func.func @transform_3(%arg0: i32) -> (i32, i32) {
    %c0_i32 = arith.constant 0 : i32
    %c0_i32_0 = arith.constant 0 : i32
    return %arg0, %c0_i32 : i32, i32
  }
  func.func @transform_4(%arg0: i32) -> (i32, i32) {
    %c0_i32 = arith.constant 0 : i32
    %c0_i32_0 = arith.constant 0 : i32
    return %arg0, %c0_i32 : i32, i32
  }
}

</mosaic_0001>

<llo_original>
// kernel: _dropout_same_shape.1
$region0: #{_dropout_same_shape.1}
  #allocation0 [shape = 'u32[]', space=smem, size = 0x4, offset = 0x4, fixed_abs, tag = 'smem constant byte address 0x4 - core index']
  #allocation1 [shape = 'u32[144,128]{1,0:T(1,128)}', space=vmem, size = 0x12000, scoped, tag = 'internal scratch']
  #allocation2 [shape = 's32[1]{0:T(128)S(6)}', space=smem, size = 0x200, scoped, tag = 'scoped memory for _dropout_same_shape.1']
  %s0 = inlined_call_operand.<no memory space> [shape: s32[1], index: 0, kind: input, shape index: {}]
  %s1 = inlined_call_operand.hbm [shape: f32[1,1024], index: 1, kind: input, shape index: {}]
  %s2 = inlined_call_operand.hbm [shape: f32[1,1024], index: 2, kind: input, shape index: {}]
  %s3 = inlined_call_operand.hbm [shape: f32[1,1024], index: 3, kind: output, shape index: {0}]
  %s4 = inlined_call_operand.hbm [shape: f32[1,1024], index: 4, kind: output, shape index: {1}]
  %5 = xla_tuple %s3, %s4
  %s6 = sld [smem:[#allocation0]]
  $region38: #{_dropout_same_shape.1} parent=0
    _
  %s8 = ssub.s32 1, %s6
  %s9 = scalar_select 0, %s8, %s6
  %10 = sst [smem:[#allocation2]] %s0
  $region1: #{_dropout_same_shape.1} parent=0
    #allocation3 [shape = 'u8[4096]{0}', space=vmem, size = 0x1000, scoped, tag = 'input window, operand 1, single buffered']
    #allocation4 [shape = 's32[1]{0}', space=sflag, size = 0x4, scoped, tag = 'scoped memory for _dropout_same_shape.1']
    #allocation5 [shape = 's32[1]{0}', space=sflag, size = 0x4, scoped, tag = 'scoped memory for _dropout_same_shape.1']
    #allocation6 [shape = 'u8[4096]{0}', space=vmem, size = 0x1000, scoped, tag = 'input window, operand 2, single buffered']
    #allocation7 [shape = 's32[1]{0}', space=sflag, size = 0x4, scoped, tag = 'scoped memory for _dropout_same_shape.1']
    #allocation8 [shape = 'u8[4096]{0}', space=vmem, size = 0x1000, scoped, tag = 'output window, operand 0, single buffered']
    #allocation9 [shape = 'u8[4096]{0}', space=vmem, size = 0x1000, scoped, tag = 'output window, operand 1, single buffered']
    #allocation10 [shape = 's32[1]{0}', space=sflag, size = 0x4, scoped, tag = 'scoped memory for _dropout_same_shape.1']
    %11 = vsyncpa [#allocation4], 0
    %12 = vsyncpa [#allocation7], 0
    %13 = vsyncpa [#allocation5], 0
    %14 = vsyncpa [#allocation10], 0
    // Predicated region
    $region2: #{_dropout_same_shape.1} parent=1 // pred_check
      _
    $region3: #{_dropout_same_shape.1} parent=1 // pred_check_branch
      %16 = sbr.rel (0) target = $region5
    $region4: #{_dropout_same_shape.1} parent=1 // pred_region
      _
    $region5: #{_dropout_same_shape.1} parent=1 // pred_fallthru
      _
    // Predicated region
    $region6: #{_dropout_same_shape.1} parent=1 // pred_check
      _
    $region7: #{_dropout_same_shape.1} parent=1 // pred_check_branch
      %18 = sbr.rel (0) target = $region9
    $region8: #{_dropout_same_shape.1} parent=1 // pred_region
      %s20 = ssub.s32 128, 128
      %21 = vsyncadd [#allocation4], %s20
      %s23 = sshll.u32 [#allocation3], 4
      %s24 = int_to_ptr.vmem [resolvable:$true] %s23
      %26 = dma.hbm_to_vmem [thread:$0]  %s1, 128, %s24, [#allocation4]
    $region9: #{_dropout_same_shape.1} parent=1 // pred_fallthru
      _
    // Predicated region
    $region10: #{_dropout_same_shape.1} parent=1 // pred_check
      _
    $region11: #{_dropout_same_shape.1} parent=1 // pred_check_branch
      %28 = sbr.rel (0) target = $region13
    $region12: #{_dropout_same_shape.1} parent=1 // pred_region
      %s30 = ssub.s32 128, 128
      %31 = vsyncadd [#allocation7], %s30
      %s33 = sshll.u32 [#allocation6], 4
      %s34 = int_to_ptr.vmem [resolvable:$true] %s33
      %36 = dma.hbm_to_vmem [thread:$0]  %s2, 128, %s34, [#allocation7]
    $region13: #{_dropout_same_shape.1} parent=1 // pred_fallthru
      _
    // Predicated region
    $region14: #{_dropout_same_shape.1} parent=1 // pred_check
      _
    $region15: #{_dropout_same_shape.1} parent=1 // pred_check_branch
      %38 = sbr.rel (0) target = $region17
    $region16: #{_dropout_same_shape.1} parent=1 // pred_region
      %39 = dma.done [#allocation4], 128
    $region17: #{_dropout_same_shape.1} parent=1 // pred_fallthru
      _
    // Predicated region
    $region18: #{_dropout_same_shape.1} parent=1 // pred_check
      _
    $region19: #{_dropout_same_shape.1} parent=1 // pred_check_branch
      %41 = sbr.rel (0) target = $region21
    $region20: #{_dropout_same_shape.1} parent=1 // pred_region
      %42 = dma.done [#allocation7], 128
    $region21: #{_dropout_same_shape.1} parent=1 // pred_fallthru
      _
    %s43 = sld [smem:[#allocation2]]
    %s44 = smul.u32 %s43, 2654435769
    %v45 = vlaneseq
    %v46 = vshrl.u32 %v45, 7
    %v47 = vstv 0
    %v48 = vadd.s32 %v46, %v47
    %v49 = vlaneseq
    %v50 = vand.u32 %v49, 127
    %v51 = vadd.s32 %v50, 128
    %v52 = vadd.s32 %v50, 256
    %v53 = vadd.s32 %v50, 384
    %v54 = vadd.s32 %v50, 512
    %v55 = vadd.s32 %v50, 640
    %v56 = vadd.s32 %v50, 768
    %v57 = vadd.s32 %v50, 896
    %v58 = vmul.u32 %v48, 1024
    %v59 = vadd.s32 %v58, %v50
    %v60 = vadd.s32 %v58, %v51
    %v61 = vadd.s32 %v58, %v52
    %v62 = vadd.s32 %v58, %v53
    %v63 = vadd.s32 %v58, %v54
    %v64 = vadd.s32 %v58, %v55
    %v65 = vadd.s32 %v58, %v56
    %v66 = vadd.s32 %v58, %v57
    %v67 = vstv %s44
    %v68 = vxor.u32 %v59, %v67
    %v69 = vxor.u32 %v60, %v67
    %v70 = vxor.u32 %v61, %v67
    %v71 = vxor.u32 %v62, %v67
    %v72 = vxor.u32 %v63, %v67
    %v73 = vxor.u32 %v64, %v67
    %v74 = vxor.u32 %v65, %v67
    %v75 = vxor.u32 %v66, %v67
    %v76 = vshrl.u32 %v68, 16
    %v77 = vshrl.u32 %v69, 16
    %v78 = vshrl.u32 %v70, 16
    %v79 = vshrl.u32 %v71, 16
    %v80 = vshrl.u32 %v72, 16
    %v81 = vshrl.u32 %v73, 16
    %v82 = vshrl.u32 %v74, 16
    %v83 = vshrl.u32 %v75, 16
    %v84 = vxor.u32 %v68, %v76
    %v85 = vxor.u32 %v69, %v77
    %v86 = vxor.u32 %v70, %v78
    %v87 = vxor.u32 %v71, %v79
    %v88 = vxor.u32 %v72, %v80
    %v89 = vxor.u32 %v73, %v81
    %v90 = vxor.u32 %v74, %v82
    %v91 = vxor.u32 %v75, %v83
    %v92 = vmul.u32 %v84, 2146121005
    %v93 = vmul.u32 %v85, 2146121005
    %v94 = vmul.u32 %v86, 2146121005
    %v95 = vmul.u32 %v87, 2146121005
    %v96 = vmul.u32 %v88, 2146121005
    %v97 = vmul.u32 %v89, 2146121005
    %v98 = vmul.u32 %v90, 2146121005
    %v99 = vmul.u32 %v91, 2146121005
    %v100 = vshrl.u32 %v92, 15
    %v101 = vshrl.u32 %v93, 15
    %v102 = vshrl.u32 %v94, 15
    %v103 = vshrl.u32 %v95, 15
    %v104 = vshrl.u32 %v96, 15
    %v105 = vshrl.u32 %v97, 15
    %v106 = vshrl.u32 %v98, 15
    %v107 = vshrl.u32 %v99, 15
    %v108 = vxor.u32 %v92, %v100
    %v109 = vxor.u32 %v93, %v101
    %v110 = vxor.u32 %v94, %v102
    %v111 = vxor.u32 %v95, %v103
    %v112 = vxor.u32 %v96, %v104
    %v113 = vxor.u32 %v97, %v105
    %v114 = vxor.u32 %v98, %v106
    %v115 = vxor.u32 %v99, %v107
    %v116 = vmul.u32 %v108, 2221713035
    %v117 = vmul.u32 %v109, 2221713035
    %v118 = vmul.u32 %v110, 2221713035
    %v119 = vmul.u32 %v111, 2221713035
    %v120 = vmul.u32 %v112, 2221713035
    %v121 = vmul.u32 %v113, 2221713035
    %v122 = vmul.u32 %v114, 2221713035
    %v123 = vmul.u32 %v115, 2221713035
    %v124 = vshrl.u32 %v116, 16
    %v125 = vshrl.u32 %v117, 16
    %v126 = vshrl.u32 %v118, 16
    %v127 = vshrl.u32 %v119, 16
    %v128 = vshrl.u32 %v120, 16
    %v129 = vshrl.u32 %v121, 16
    %v130 = vshrl.u32 %v122, 16
    %v131 = vshrl.u32 %v123, 16
    %v132 = vxor.u32 %v116, %v124
    %v133 = vxor.u32 %v117, %v125
    %v134 = vxor.u32 %v118, %v126
    %v135 = vxor.u32 %v119, %v127
    %v136 = vxor.u32 %v120, %v128
    %v137 = vxor.u32 %v121, %v129
    %v138 = vxor.u32 %v122, %v130
    %v139 = vxor.u32 %v123, %v131
    %v140 = vmul.u32 %v132, 2246822507
    %v141 = vmul.u32 %v133, 2246822507
    %v142 = vmul.u32 %v134, 2246822507
    %v143 = vmul.u32 %v135, 2246822507
    %v144 = vmul.u32 %v136, 2246822507
    %v145 = vmul.u32 %v137, 2246822507
    %v146 = vmul.u32 %v138, 2246822507
    %v147 = vmul.u32 %v139, 2246822507
    %v148 = vshrl.u32 %v140, 16
    %v149 = vshrl.u32 %v141, 16
    %v150 = vshrl.u32 %v142, 16
    %v151 = vshrl.u32 %v143, 16
    %v152 = vshrl.u32 %v144, 16
    %v153 = vshrl.u32 %v145, 16
    %v154 = vshrl.u32 %v146, 16
    %v155 = vshrl.u32 %v147, 16
    %v156 = vxor.u32 %v140, %v148
    %v157 = vxor.u32 %v141, %v149
    %v158 = vxor.u32 %v142, %v150
    %v159 = vxor.u32 %v143, %v151
    %v160 = vxor.u32 %v144, %v152
    %v161 = vxor.u32 %v145, %v153
    %v162 = vxor.u32 %v146, %v154
    %v163 = vxor.u32 %v147, %v155
    %vm164 = vcmp.lt.u32.totalorder %v156, 3865470566
    %vm165 = vcmp.lt.u32.totalorder %v157, 3865470566
    %vm166 = vcmp.lt.u32.totalorder %v158, 3865470566
    %vm167 = vcmp.lt.u32.totalorder %v159, 3865470566
    %vm168 = vcmp.lt.u32.totalorder %v160, 3865470566
    %vm169 = vcmp.lt.u32.totalorder %v161, 3865470566
    %vm170 = vcmp.lt.u32.totalorder %v162, 3865470566
    %vm171 = vcmp.lt.u32.totalorder %v163, 3865470566
    %v172 = vld [vmem:[#allocation3] sm:$0xff]
    %v173 = vmul.f32 %v172, 1.1111112
    %v175 = vlaneseq
    %v176 = vshrl.u32 %v175, 7
    %v177 = vsub.s32 0, %v176
    %v178 = vrot.slane %v173, %v177
    %v179 = vlaneseq
    %v180 = vshrl.u32 %v179, 7
    %v181 = vsub.s32 1, %v180
    %v182 = vrot.slane %v173, %v181
    %v183 = vlaneseq
    %v184 = vshrl.u32 %v183, 7
    %v185 = vsub.s32 2, %v184
    %v186 = vrot.slane %v173, %v185
    %v187 = vlaneseq
    %v188 = vshrl.u32 %v187, 7
    %v189 = vsub.s32 3, %v188
    %v190 = vrot.slane %v173, %v189
    %v191 = vlaneseq
    %v192 = vshrl.u32 %v191, 7
    %v193 = vsub.s32 4, %v192
    %v194 = vrot.slane %v173, %v193
    %v195 = vlaneseq
    %v196 = vshrl.u32 %v195, 7
    %v197 = vsub.s32 5, %v196
    %v198 = vrot.slane %v173, %v197
    %v199 = vlaneseq
    %v200 = vshrl.u32 %v199, 7
    %v201 = vsub.s32 6, %v200
    %v202 = vrot.slane %v173, %v201
    %v203 = vlaneseq
    %v204 = vshrl.u32 %v203, 7
    %v205 = vsub.s32 7, %v204
    %v206 = vrot.slane %v173, %v205
    %v215 = vsel %vm164, %v178, 0.0
    %v216 = vsel %vm165, %v182, 0.0
    %v217 = vsel %vm166, %v186, 0.0
    %v218 = vsel %vm167, %v190, 0.0
    %v219 = vsel %vm168, %v194, 0.0
    %v220 = vsel %vm169, %v198, 0.0
    %v221 = vsel %vm170, %v202, 0.0
    %v222 = vsel %vm171, %v206, 0.0
    %v231 = vcombine.low %v215, %v216
    %v232 = vcombine.low %v217, %v218
    %v233 = vcombine.low %v219, %v220
    %v234 = vcombine.low %v221, %v222
    %v236 = vunpack.c.l.s4 1966171168
    %v237 = vunpack.c.0.s8 %v236
    %v238 = vlaneseq
    %v239 = vshrl.u32 %v238, 7
    %v240 = vsub.s32 %v237, %v239
    %v241 = vrot.slane %v231, %v240
    %v243 = vunpack.c.l.s4 1966171168
    %v244 = vunpack.c.0.s8 %v243
    %v245 = vlaneseq
    %v246 = vshrl.u32 %v245, 7
    %v247 = vsub.s32 %v244, %v246
    %v248 = vrot.slane %v232, %v247
    %v250 = vunpack.c.l.s4 1966171168
    %v251 = vunpack.c.0.s8 %v250
    %v252 = vlaneseq
    %v253 = vshrl.u32 %v252, 7
    %v254 = vsub.s32 %v251, %v253
    %v255 = vrot.slane %v233, %v254
    %v257 = vunpack.c.l.s4 1966171168
    %v258 = vunpack.c.0.s8 %v257
    %v259 = vlaneseq
    %v260 = vshrl.u32 %v259, 7
    %v261 = vsub.s32 %v258, %v260
    %v262 = vrot.slane %v234, %v261
    %v263 = vcombine.low %v241, %v248
    %v264 = vcombine.low %v255, %v262
    %v266 = vunpack.c.l.s4 1966171168
    %v267 = vunpack.c.0.s8 %v266
    %v268 = vlaneseq
    %v269 = vshrl.u32 %v268, 7
    %v270 = vsub.s32 %v267, %v269
    %v271 = vrot.slane %v263, %v270
    %v273 = vunpack.c.l.s4 1966171168
    %v274 = vunpack.c.0.s8 %v273
    %v275 = vlaneseq
    %v276 = vshrl.u32 %v275, 7
    %v277 = vsub.s32 %v274, %v276
    %v278 = vrot.slane %v264, %v277
    %v279 = vcombine.low %v271, %v278
    %281 = vst [vmem:[#allocation8] sm:$0xff] %v279
    %v282 = vmul.u32 %v132, 198677719
    %v283 = vmul.u32 %v133, 198677719
    %v284 = vmul.u32 %v134, 198677719
    %v285 = vmul.u32 %v135, 198677719
    %v286 = vmul.u32 %v136, 198677719
    %v287 = vmul.u32 %v137, 198677719
    %v288 = vmul.u32 %v138, 198677719
    %v289 = vmul.u32 %v139, 198677719
    %v290 = vshrl.u32 %v282, 16
    %v291 = vshrl.u32 %v283, 16
    %v292 = vshrl.u32 %v284, 16
    %v293 = vshrl.u32 %v285, 16
    %v294 = vshrl.u32 %v286, 16
    %v295 = vshrl.u32 %v287, 16
    %v296 = vshrl.u32 %v288, 16
    %v297 = vshrl.u32 %v289, 16
    %v298 = vxor.u32 %v282, %v290
    %v299 = vxor.u32 %v283, %v291
    %v300 = vxor.u32 %v284, %v292
    %v301 = vxor.u32 %v285, %v293
    %v302 = vxor.u32 %v286, %v294
    %v303 = vxor.u32 %v287, %v295
    %v304 = vxor.u32 %v288, %v296
    %v305 = vxor.u32 %v289, %v297
    %vm306 = vcmp.lt.u32.totalorder %v298, 3435973836
    %vm307 = vcmp.lt.u32.totalorder %v299, 3435973836
    %vm308 = vcmp.lt.u32.totalorder %v300, 3435973836
    %vm309 = vcmp.lt.u32.totalorder %v301, 3435973836
    %vm310 = vcmp.lt.u32.totalorder %v302, 3435973836
    %vm311 = vcmp.lt.u32.totalorder %v303, 3435973836
    %vm312 = vcmp.lt.u32.totalorder %v304, 3435973836
    %vm313 = vcmp.lt.u32.totalorder %v305, 3435973836
    %v314 = vld [vmem:[#allocation6] sm:$0xff]
    %v315 = vmul.f32 %v314, 1.25
    %v317 = vlaneseq
    %v318 = vshrl.u32 %v317, 7
    %v319 = vsub.s32 0, %v318
    %v320 = vrot.slane %v315, %v319
    %v321 = vlaneseq
    %v322 = vshrl.u32 %v321, 7
    %v323 = vsub.s32 1, %v322
    %v324 = vrot.slane %v315, %v323
    %v325 = vlaneseq
    %v326 = vshrl.u32 %v325, 7
    %v327 = vsub.s32 2, %v326
    %v328 = vrot.slane %v315, %v327
    %v329 = vlaneseq
    %v330 = vshrl.u32 %v329, 7
    %v331 = vsub.s32 3, %v330
    %v332 = vrot.slane %v315, %v331
    %v333 = vlaneseq
    %v334 = vshrl.u32 %v333, 7
    %v335 = vsub.s32 4, %v334
    %v336 = vrot.slane %v315, %v335
    %v337 = vlaneseq
    %v338 = vshrl.u32 %v337, 7
    %v339 = vsub.s32 5, %v338
    %v340 = vrot.slane %v315, %v339
    %v341 = vlaneseq
    %v342 = vshrl.u32 %v341, 7
    %v343 = vsub.s32 6, %v342
    %v344 = vrot.slane %v315, %v343
    %v345 = vlaneseq
    %v346 = vshrl.u32 %v345, 7
    %v347 = vsub.s32 7, %v346
    %v348 = vrot.slane %v315, %v347
    %v357 = vsel %vm306, %v320, 0.0
    %v358 = vsel %vm307, %v324, 0.0
    %v359 = vsel %vm308, %v328, 0.0
    %v360 = vsel %vm309, %v332, 0.0
    %v361 = vsel %vm310, %v336, 0.0
    %v362 = vsel %vm311, %v340, 0.0
    %v363 = vsel %vm312, %v344, 0.0
    %v364 = vsel %vm313, %v348, 0.0
    %v373 = vcombine.low %v357, %v358
    %v374 = vcombine.low %v359, %v360
    %v375 = vcombine.low %v361, %v362
    %v376 = vcombine.low %v363, %v364
    %v378 = vunpack.c.l.s4 1966171168
    %v379 = vunpack.c.0.s8 %v378
    %v380 = vlaneseq
    %v381 = vshrl.u32 %v380, 7
    %v382 = vsub.s32 %v379, %v381
    %v383 = vrot.slane %v373, %v382
    %v385 = vunpack.c.l.s4 1966171168
    %v386 = vunpack.c.0.s8 %v385
    %v387 = vlaneseq
    %v388 = vshrl.u32 %v387, 7
    %v389 = vsub.s32 %v386, %v388
    %v390 = vrot.slane %v374, %v389
    %v392 = vunpack.c.l.s4 1966171168
    %v393 = vunpack.c.0.s8 %v392
    %v394 = vlaneseq
    %v395 = vshrl.u32 %v394, 7
    %v396 = vsub.s32 %v393, %v395
    %v397 = vrot.slane %v375, %v396
    %v399 = vunpack.c.l.s4 1966171168
    %v400 = vunpack.c.0.s8 %v399
    %v401 = vlaneseq
    %v402 = vshrl.u32 %v401, 7
    %v403 = vsub.s32 %v400, %v402
    %v404 = vrot.slane %v376, %v403
    %v405 = vcombine.low %v383, %v390
    %v406 = vcombine.low %v397, %v404
    %v408 = vunpack.c.l.s4 1966171168
    %v409 = vunpack.c.0.s8 %v408
    %v410 = vlaneseq
    %v411 = vshrl.u32 %v410, 7
    %v412 = vsub.s32 %v409, %v411
    %v413 = vrot.slane %v405, %v412
    %v415 = vunpack.c.l.s4 1966171168
    %v416 = vunpack.c.0.s8 %v415
    %v417 = vlaneseq
    %v418 = vshrl.u32 %v417, 7
    %v419 = vsub.s32 %v416, %v418
    %v420 = vrot.slane %v406, %v419
    %v421 = vcombine.low %v413, %v420
    %423 = vst [vmem:[#allocation9] sm:$0xff] %v421
    // Predicated region
    $region22: #{_dropout_same_shape.1} parent=1 // pred_check
      _
    $region23: #{_dropout_same_shape.1} parent=1 // pred_check_branch
      %425 = sbr.rel (0) target = $region25
    $region24: #{_dropout_same_shape.1} parent=1 // pred_region
      %s427 = ssub.s32 128, 128
      %428 = vsyncadd [#allocation5], %s427
      %s430 = sshll.u32 [#allocation8], 4
      %s431 = int_to_ptr.vmem [resolvable:$true] %s430
      %433 = dma.vmem_to_hbm [thread:$0]  %s431, 128, %s3, [#allocation5]
    $region25: #{_dropout_same_shape.1} parent=1 // pred_fallthru
      _
    // Predicated region
    $region26: #{_dropout_same_shape.1} parent=1 // pred_check
      _
    $region27: #{_dropout_same_shape.1} parent=1 // pred_check_branch
      %435 = sbr.rel (0) target = $region29
    $region28: #{_dropout_same_shape.1} parent=1 // pred_region
      %s437 = ssub.s32 128, 128
      %438 = vsyncadd [#allocation10], %s437
      %s440 = sshll.u32 [#allocation9], 4
      %s441 = int_to_ptr.vmem [resolvable:$true] %s440
      %443 = dma.vmem_to_hbm [thread:$0]  %s441, 128, %s4, [#allocation10]
    $region29: #{_dropout_same_shape.1} parent=1 // pred_fallthru
      _
    // Predicated region
    $region30: #{_dropout_same_shape.1} parent=1 // pred_check
      _
    $region31: #{_dropout_same_shape.1} parent=1 // pred_check_branch
      %445 = sbr.rel (0) target = $region33
    $region32: #{_dropout_same_shape.1} parent=1 // pred_region
      %446 = dma.done [#allocation5], 128
    $region33: #{_dropout_same_shape.1} parent=1 // pred_fallthru
      _
    // Predicated region
    $region34: #{_dropout_same_shape.1} parent=1 // pred_check
      _
    $region35: #{_dropout_same_shape.1} parent=1 // pred_check_branch
      %448 = sbr.rel (0) target = $region37
    $region36: #{_dropout_same_shape.1} parent=1 // pred_region
      %449 = dma.done [#allocation10], 128
    $region37: #{_dropout_same_shape.1} parent=1 // pred_fallthru
      _
    %450 = vsyncpa [#allocation4], 1
    %451 = vsyncpa [#allocation7], 1
    %452 = vsyncpa [#allocation5], 1
    %453 = vsyncpa [#allocation10], 1

</llo_original>
